<compile_context>
chip_gen: v6e
topology: v6e:2x2x1
jax: 0.10.0
libtpu: 0.0.40
codegen_flags: <defaults>
</compile_context>

<pallas_src>
import functools

import jax
import jax.numpy as jnp
from jax import lax
from jax.experimental import pallas as pl
from jax.experimental.pallas import tpu as pltpu


# ---------------- fused Pallas kernel (one out_features tile per grid step) ----------------

def _fused_kernel(theta_d_ref, x_ref, dense_w_ref, dense_b_ref,
                  theta0_w_ref, theta0_b_ref, y_ref, *, int_dim):
    # --- set_module_weights(): theta = theta_0 + sum_k theta_d[k] * dense[k] --------------
    # Lane-dense VPU multiply-accumulate over the intrinsic dimension. dense tiles are bf16
    # (halved HBM traffic); upcast to f32 here, accumulation stays f32 (theta0 + small delta
    # is cancellation-prone).
    w = theta0_w_ref[...]                              # (in_f, out_tile)  f32, W^T layout
    b = theta0_b_ref[...]                              # (1,    out_tile)  f32
    # TODO(synk): switch to lax.fori_loop(..., unroll=True)/chunked unroll once int_dim > ~16
    # (static Python unroll does not bound vreg live ranges).
    for k in range(int_dim):
        t = theta_d_ref[k]                             # f32 scalar read from SMEM (free)
        w = w + t * dense_w_ref[k].astype(jnp.float32)
        b = b + t * dense_b_ref[k].astype(jnp.float32)

    # --- hidden[0](input): y = x @ W^T + b -------------------------------------------------
    # Canonical (M,K)x(K,N): K = in_f on W's sublanes, out_f lane-dense -> no XLU relayout,
    # unmasked lane-dense stores of y.
    y = lax.dot_general(
        x_ref[...], w,
        dimension_numbers=(((1,), (0,)), ((), ())),
        preferred_element_type=jnp.float32,
    )
    y_ref[...] = y + b


# ---------------- one-time layout prep (init-time, hoisted off the forward path) -----------

def prepare_params(params, *, out_tile=128):
    """Precompute the streamed-friendly layouts once (DenseWrapperGraphed.__init__ analog).

    torch flattens a (out_f, in_f) weight row-major (flat = o*in_f + i), so column k of
    dense_w reshapes to (out_f, in_f); each slice is then transposed to (in_f, out_f) so the
    rematerialized W^T is built directly in MXU-canonical, lane-dense layout.
    """
    theta0_w = jnp.asarray(params["theta0_w"], jnp.float32)            # (out_f, in_f)
    theta0_b = jnp.asarray(params["theta0_b"], jnp.float32)            # (out_f,)
    theta_d = jnp.asarray(params["theta_d"], jnp.float32).reshape(-1)  # (int_dim,)
    int_dim = theta_d.shape[0]
    out_f, in_f = theta0_w.shape

    # Frozen random projections -> bf16 (dominant HBM stream at scale; safe per review).
    dense_w = jnp.asarray(params["dense_w"], jnp.bfloat16)             # (out_f*in_f, int_dim)
    dense_b = jnp.asarray(params["dense_b"], jnp.bfloat16)             # (out_f,      int_dim)

    dense_w_p = dense_w.T.reshape(int_dim, out_f, in_f).transpose(0, 2, 1)  # (d, in_f, out_f)
    dense_b_p = dense_b.T.reshape(int_dim, 1, out_f)                        # (d, 1,    out_f)
    theta0_w_t = theta0_w.T                                                 # (in_f, out_f)
    theta0_b_2 = theta0_b.reshape(1, out_f)                                 # (1,    out_f)

    # Pad out_f to a 128-lane tile multiple (zero columns -> sliced off after the kernel).
    out_f_pad = ((out_f + out_tile - 1) // out_tile) * out_tile
    pad = out_f_pad - out_f
    if pad:
        dense_w_p = jnp.pad(dense_w_p, ((0, 0), (0, 0), (0, pad)))
        dense_b_p = jnp.pad(dense_b_p, ((0, 0), (0, 0), (0, pad)))
        theta0_w_t = jnp.pad(theta0_w_t, ((0, 0), (0, pad)))
        theta0_b_2 = jnp.pad(theta0_b_2, ((0, 0), (0, pad)))

    return {
        "theta_d": theta_d,
        "dense_w_p": dense_w_p,
        "dense_b_p": dense_b_p,
        "theta0_w_t": theta0_w_t,
        "theta0_b_2": theta0_b_2,
        "out_f": out_f,
        "out_tile": out_tile,
    }


# ---------------- forward (DenseWrapperGraphed.forward analog) -----------------------------

def dense_wrapper_forward(x, prepped):
    theta_d = prepped["theta_d"]
    dense_w_p = prepped["dense_w_p"]
    dense_b_p = prepped["dense_b_p"]
    theta0_w_t = prepped["theta0_w_t"]
    theta0_b_2 = prepped["theta0_b_2"]
    out_f = prepped["out_f"]
    out_tile = prepped["out_tile"]

    int_dim = theta_d.shape[0]
    in_f, out_f_pad = theta0_w_t.shape
    batch = x.shape[0]
    n_tiles = out_f_pad // out_tile

    # Explicit VMEM budget: double-buffered streamed tiles + resident x + headroom.
    # (Review: size tiles against v7x's 64 MiB; for real D shrink out_tile accordingly.)
    streamed_tile_bytes = (int_dim * in_f * out_tile * 2     # dense_w tile (bf16)
                           + int_dim * 1 * out_tile * 2      # dense_b tile (bf16)
                           + in_f * out_tile * 4             # theta0_w^T tile (f32)
                           + 1 * out_tile * 4                # theta0_b tile (f32)
                           + batch * out_tile * 4)           # y tile (f32)
    vmem_bytes = 2 * streamed_tile_bytes + batch * in_f * 4 + (2 << 20)
    vmem_bytes = int(min(max(vmem_bytes, 16 << 20), 48 << 20))

    # TODO(synk): for very large wrapped layers additionally tile in_f as an innermost
    # "arbitrary" reduction axis with a VMEM W-tile accumulator (pl.when init/finalize).

    smem = pl.BlockSpec(memory_space=pltpu.MemorySpace.SMEM)   # theta_d: resident scalars

    y = pl.pallas_call(
        functools.partial(_fused_kernel, int_dim=int_dim),
        out_shape=jax.ShapeDtypeStruct((batch, out_f_pad), jnp.float32),
        grid=(n_tiles,),
        in_specs=[
            smem,                                                            # theta_d
            pl.BlockSpec((batch, in_f), lambda j: (0, 0)),                   # x: resident
            pl.BlockSpec((int_dim, in_f, out_tile), lambda j: (0, 0, j)),    # dense_w: stream
            pl.BlockSpec((int_dim, 1, out_tile), lambda j: (0, 0, j)),       # dense_b: stream
            pl.BlockSpec((in_f, out_tile), lambda j: (0, j)),                # theta0_w^T
            pl.BlockSpec((1, out_tile), lambda j: (0, j)),                   # theta0_b
        ],
        out_specs=pl.BlockSpec((batch, out_tile), lambda j: (0, j)),
        compiler_params=pltpu.CompilerParams(
            dimension_semantics=("parallel",),     # v7x: shard out_f tiles across both TCs
            vmem_limit_bytes=vmem_bytes,
        ),
    )(theta_d, x, dense_w_p, dense_b_p, theta0_w_t, theta0_b_2)

    if out_f_pad != out_f:
        y = y[:, :out_f]
    return y


# ---------------- pure-JAX reference (original (D, d) formulation) --------------------------

def reference_forward(x, theta0_w, theta0_b, dense_w, dense_b, theta_d):
    dw = jnp.asarray(dense_w, jnp.float32)
    db = jnp.asarray(dense_b, jnp.float32)
    w = theta0_w + (dw @ theta_d).reshape(theta0_w.shape)
    b = theta0_b + (db @ theta_d).reshape(theta0_b.shape)
    return x @ w.T + b[None, :]


if __name__ == "__main__":
    batch, in_features, out_features, int_dim = 8, 32, 256, 8

    key = jax.random.PRNGKey(0)
    k_w, k_b, k_dw, k_db, k_d, k_x = jax.random.split(key, 6)

    # theta_0: frozen initial params of the wrapped Linear module.
    theta0_w = jax.random.normal(k_w, (out_features, in_features), jnp.float32) * 0.1
    theta0_b = jax.random.normal(k_b, (out_features,), jnp.float32) * 0.1
    # DenseProjection.W = torch.rand(D, d); frozen random projections stored in bf16
    # (same quantized values feed both the kernel and the reference).
    dense_w = jax.random.uniform(
        k_dw, (out_features * in_features, int_dim), jnp.float32).astype(jnp.bfloat16)
    dense_b = jax.random.uniform(
        k_db, (out_features, int_dim), jnp.float32).astype(jnp.bfloat16)
    # theta_d is a Parameter initialized to zeros; small nonzero values exercise the path.
    theta_d = jax.random.normal(k_d, (int_dim, 1), jnp.float32) * 0.01

    x = jax.random.normal(k_x, (batch, in_features), jnp.float32)

    params = {"theta0_w": theta0_w, "theta0_b": theta0_b,
              "dense_w": dense_w, "dense_b": dense_b, "theta_d": theta_d}
    prepped = prepare_params(params, out_tile=128)   # init-time, hoisted off forward

    y = dense_wrapper_forward(x, prepped)
    y = jax.block_until_ready(y)

    y_ref = reference_forward(x, theta0_w, theta0_b, dense_w, dense_b, theta_d)
    assert y.shape == (batch, out_features)
    assert jnp.allclose(y, y_ref, atol=1e-5, rtol=1e-5), "mismatch vs reference"

    print("KERNEL_OK")
</pallas_src>

<mosaic_0001>
module attributes {stable_mosaic.version = 11 : i64} {
  func.func @_fused_kernel(%arg0: i32, %arg1: memref<8xf32, #tpu.memory_space<smem>>, %arg2: memref<8x32xf32, #tpu.memory_space<vmem>>, %arg3: memref<8x32x128xbf16, #tpu.memory_space<vmem>>, %arg4: memref<8x1x128xbf16, #tpu.memory_space<vmem>>, %arg5: memref<32x128xf32, #tpu.memory_space<vmem>>, %arg6: memref<1x128xf32, #tpu.memory_space<vmem>>, %arg7: memref<8x128xf32, #tpu.memory_space<vmem>>) attributes {dimension_semantics = [#tpu.dimension_semantics<parallel>], iteration_bounds = array<i64: 2>, scalar_prefetch = 0 : i64, scratch_operands = 0 : i64, tpu.core_type = #tpu.core_type<tc>, window_params = [{transform_indices = @transform_0, window_bounds = array<i64: 8>}, {pipeline_mode = #tpu.pipeline_mode<synchronous>, transform_indices = @transform_1, window_bounds = array<i64: 8, 32>}, {transform_indices = @transform_2, window_bounds = array<i64: 8, 32, 128>}, {transform_indices = @transform_3, window_bounds = array<i64: 8, 1, 128>}, {transform_indices = @transform_4, window_bounds = array<i64: 32, 128>}, {transform_indices = @transform_5, window_bounds = array<i64: 1, 128>}, {transform_indices = @transform_6, window_bounds = array<i64: 8, 128>}]} {
    %c0 = arith.constant 0 : index
    %c0_0 = arith.constant 0 : index
    %0 = vector.load %arg5[%c0, %c0_0] : memref<32x128xf32, #tpu.memory_space<vmem>>, vector<32x128xf32>
    %c0_1 = arith.constant 0 : index
    %c0_2 = arith.constant 0 : index
    %1 = vector.load %arg6[%c0_1, %c0_2] : memref<1x128xf32, #tpu.memory_space<vmem>>, vector<1x128xf32>
    %c0_3 = arith.constant 0 : index
    %2 = memref.load %arg1[%c0_3] : memref<8xf32, #tpu.memory_space<smem>>
    %c0_4 = arith.constant 0 : index
    %c0_5 = arith.constant 0 : index
    %c0_6 = arith.constant 0 : index
    %3 = vector.load %arg3[%c0_4, %c0_5, %c0_6] : memref<8x32x128xbf16, #tpu.memory_space<vmem>>, vector<1x32x128xbf16>
    %4 = vector.shape_cast %3 : vector<1x32x128xbf16> to vector<32x128xbf16>
    %5 = arith.extf %4 : vector<32x128xbf16> to vector<32x128xf32>
    %6 = vector.broadcast %2 : f32 to vector<32x128xf32>
    %7 = arith.mulf %6, %5 : vector<32x128xf32>
    %8 = arith.addf %0, %7 : vector<32x128xf32>
    %c0_7 = arith.constant 0 : index
    %c0_8 = arith.constant 0 : index
    %c0_9 = arith.constant 0 : index
    %9 = vector.load %arg4[%c0_7, %c0_8, %c0_9] : memref<8x1x128xbf16, #tpu.memory_space<vmem>>, vector<1x1x128xbf16>
    %10 = vector.shape_cast %9 : vector<1x1x128xbf16> to vector<1x128xbf16>
    %11 = arith.extf %10 : vector<1x128xbf16> to vector<1x128xf32>
    %12 = vector.broadcast %2 : f32 to vector<1x128xf32>
    %13 = arith.mulf %12, %11 : vector<1x128xf32>
    %14 = arith.addf %1, %13 : vector<1x128xf32>
    %c1 = arith.constant 1 : index
    %15 = memref.load %arg1[%c1] : memref<8xf32, #tpu.memory_space<smem>>
    %c1_10 = arith.constant 1 : index
    %c0_11 = arith.constant 0 : index
    %c0_12 = arith.constant 0 : index
    %16 = vector.load %arg3[%c1_10, %c0_11, %c0_12] : memref<8x32x128xbf16, #tpu.memory_space<vmem>>, vector<1x32x128xbf16>
    %17 = vector.shape_cast %16 : vector<1x32x128xbf16> to vector<32x128xbf16>
    %18 = arith.extf %17 : vector<32x128xbf16> to vector<32x128xf32>
    %19 = vector.broadcast %15 : f32 to vector<32x128xf32>
    %20 = arith.mulf %19, %18 : vector<32x128xf32>
    %21 = arith.addf %8, %20 : vector<32x128xf32>
    %c1_13 = arith.constant 1 : index
    %c0_14 = arith.constant 0 : index
    %c0_15 = arith.constant 0 : index
    %22 = vector.load %arg4[%c1_13, %c0_14, %c0_15] : memref<8x1x128xbf16, #tpu.memory_space<vmem>>, vector<1x1x128xbf16>
    %23 = vector.shape_cast %22 : vector<1x1x128xbf16> to vector<1x128xbf16>
    %24 = arith.extf %23 : vector<1x128xbf16> to vector<1x128xf32>
    %25 = vector.broadcast %15 : f32 to vector<1x128xf32>
    %26 = arith.mulf %25, %24 : vector<1x128xf32>
    %27 = arith.addf %14, %26 : vector<1x128xf32>
    %c2 = arith.constant 2 : index
    %28 = memref.load %arg1[%c2] : memref<8xf32, #tpu.memory_space<smem>>
    %c2_16 = arith.constant 2 : index
    %c0_17 = arith.constant 0 : index
    %c0_18 = arith.constant 0 : index
    %29 = vector.load %arg3[%c2_16, %c0_17, %c0_18] : memref<8x32x128xbf16, #tpu.memory_space<vmem>>, vector<1x32x128xbf16>
    %30 = vector.shape_cast %29 : vector<1x32x128xbf16> to vector<32x128xbf16>
    %31 = arith.extf %30 : vector<32x128xbf16> to vector<32x128xf32>
    %32 = vector.broadcast %28 : f32 to vector<32x128xf32>
    %33 = arith.mulf %32, %31 : vector<32x128xf32>
    %34 = arith.addf %21, %33 : vector<32x128xf32>
    %c2_19 = arith.constant 2 : index
    %c0_20 = arith.constant 0 : index
    %c0_21 = arith.constant 0 : index
    %35 = vector.load %arg4[%c2_19, %c0_20, %c0_21] : memref<8x1x128xbf16, #tpu.memory_space<vmem>>, vector<1x1x128xbf16>
    %36 = vector.shape_cast %35 : vector<1x1x128xbf16> to vector<1x128xbf16>
    %37 = arith.extf %36 : vector<1x128xbf16> to vector<1x128xf32>
    %38 = vector.broadcast %28 : f32 to vector<1x128xf32>
    %39 = arith.mulf %38, %37 : vector<1x128xf32>
    %40 = arith.addf %27, %39 : vector<1x128xf32>
    %c3 = arith.constant 3 : index
    %41 = memref.load %arg1[%c3] : memref<8xf32, #tpu.memory_space<smem>>
    %c3_22 = arith.constant 3 : index
    %c0_23 = arith.constant 0 : index
    %c0_24 = arith.constant 0 : index
    %42 = vector.load %arg3[%c3_22, %c0_23, %c0_24] : memref<8x32x128xbf16, #tpu.memory_space<vmem>>, vector<1x32x128xbf16>
    %43 = vector.shape_cast %42 : vector<1x32x128xbf16> to vector<32x128xbf16>
    %44 = arith.extf %43 : vector<32x128xbf16> to vector<32x128xf32>
    %45 = vector.broadcast %41 : f32 to vector<32x128xf32>
    %46 = arith.mulf %45, %44 : vector<32x128xf32>
    %47 = arith.addf %34, %46 : vector<32x128xf32>
    %c3_25 = arith.constant 3 : index
    %c0_26 = arith.constant 0 : index
    %c0_27 = arith.constant 0 : index
    %48 = vector.load %arg4[%c3_25, %c0_26, %c0_27] : memref<8x1x128xbf16, #tpu.memory_space<vmem>>, vector<1x1x128xbf16>
    %49 = vector.shape_cast %48 : vector<1x1x128xbf16> to vector<1x128xbf16>
    %50 = arith.extf %49 : vector<1x128xbf16> to vector<1x128xf32>
    %51 = vector.broadcast %41 : f32 to vector<1x128xf32>
    %52 = arith.mulf %51, %50 : vector<1x128xf32>
    %53 = arith.addf %40, %52 : vector<1x128xf32>
    %c4 = arith.constant 4 : index
    %54 = memref.load %arg1[%c4] : memref<8xf32, #tpu.memory_space<smem>>
    %c4_28 = arith.constant 4 : index
    %c0_29 = arith.constant 0 : index
    %c0_30 = arith.constant 0 : index
    %55 = vector.load %arg3[%c4_28, %c0_29, %c0_30] : memref<8x32x128xbf16, #tpu.memory_space<vmem>>, vector<1x32x128xbf16>
    %56 = vector.shape_cast %55 : vector<1x32x128xbf16> to vector<32x128xbf16>
    %57 = arith.extf %56 : vector<32x128xbf16> to vector<32x128xf32>
    %58 = vector.broadcast %54 : f32 to vector<32x128xf32>
    %59 = arith.mulf %58, %57 : vector<32x128xf32>
    %60 = arith.addf %47, %59 : vector<32x128xf32>
    %c4_31 = arith.constant 4 : index
    %c0_32 = arith.constant 0 : index
    %c0_33 = arith.constant 0 : index
    %61 = vector.load %arg4[%c4_31, %c0_32, %c0_33] : memref<8x1x128xbf16, #tpu.memory_space<vmem>>, vector<1x1x128xbf16>
    %62 = vector.shape_cast %61 : vector<1x1x128xbf16> to vector<1x128xbf16>
    %63 = arith.extf %62 : vector<1x128xbf16> to vector<1x128xf32>
    %64 = vector.broadcast %54 : f32 to vector<1x128xf32>
    %65 = arith.mulf %64, %63 : vector<1x128xf32>
    %66 = arith.addf %53, %65 : vector<1x128xf32>
    %c5 = arith.constant 5 : index
    %67 = memref.load %arg1[%c5] : memref<8xf32, #tpu.memory_space<smem>>
    %c5_34 = arith.constant 5 : index
    %c0_35 = arith.constant 0 : index
    %c0_36 = arith.constant 0 : index
    %68 = vector.load %arg3[%c5_34, %c0_35, %c0_36] : memref<8x32x128xbf16, #tpu.memory_space<vmem>>, vector<1x32x128xbf16>
    %69 = vector.shape_cast %68 : vector<1x32x128xbf16> to vector<32x128xbf16>
    %70 = arith.extf %69 : vector<32x128xbf16> to vector<32x128xf32>
    %71 = vector.broadcast %67 : f32 to vector<32x128xf32>
    %72 = arith.mulf %71, %70 : vector<32x128xf32>
    %73 = arith.addf %60, %72 : vector<32x128xf32>
    %c5_37 = arith.constant 5 : index
    %c0_38 = arith.constant 0 : index
    %c0_39 = arith.constant 0 : index
    %74 = vector.load %arg4[%c5_37, %c0_38, %c0_39] : memref<8x1x128xbf16, #tpu.memory_space<vmem>>, vector<1x1x128xbf16>
    %75 = vector.shape_cast %74 : vector<1x1x128xbf16> to vector<1x128xbf16>
    %76 = arith.extf %75 : vector<1x128xbf16> to vector<1x128xf32>
    %77 = vector.broadcast %67 : f32 to vector<1x128xf32>
    %78 = arith.mulf %77, %76 : vector<1x128xf32>
    %79 = arith.addf %66, %78 : vector<1x128xf32>
    %c6 = arith.constant 6 : index
    %80 = memref.load %arg1[%c6] : memref<8xf32, #tpu.memory_space<smem>>
    %c6_40 = arith.constant 6 : index
    %c0_41 = arith.constant 0 : index
    %c0_42 = arith.constant 0 : index
    %81 = vector.load %arg3[%c6_40, %c0_41, %c0_42] : memref<8x32x128xbf16, #tpu.memory_space<vmem>>, vector<1x32x128xbf16>
    %82 = vector.shape_cast %81 : vector<1x32x128xbf16> to vector<32x128xbf16>
    %83 = arith.extf %82 : vector<32x128xbf16> to vector<32x128xf32>
    %84 = vector.broadcast %80 : f32 to vector<32x128xf32>
    %85 = arith.mulf %84, %83 : vector<32x128xf32>
    %86 = arith.addf %73, %85 : vector<32x128xf32>
    %c6_43 = arith.constant 6 : index
    %c0_44 = arith.constant 0 : index
    %c0_45 = arith.constant 0 : index
    %87 = vector.load %arg4[%c6_43, %c0_44, %c0_45] : memref<8x1x128xbf16, #tpu.memory_space<vmem>>, vector<1x1x128xbf16>
    %88 = vector.shape_cast %87 : vector<1x1x128xbf16> to vector<1x128xbf16>
    %89 = arith.extf %88 : vector<1x128xbf16> to vector<1x128xf32>
    %90 = vector.broadcast %80 : f32 to vector<1x128xf32>
    %91 = arith.mulf %90, %89 : vector<1x128xf32>
    %92 = arith.addf %79, %91 : vector<1x128xf32>
    %c7 = arith.constant 7 : index
    %93 = memref.load %arg1[%c7] : memref<8xf32, #tpu.memory_space<smem>>
    %c7_46 = arith.constant 7 : index
    %c0_47 = arith.constant 0 : index
    %c0_48 = arith.constant 0 : index
    %94 = vector.load %arg3[%c7_46, %c0_47, %c0_48] : memref<8x32x128xbf16, #tpu.memory_space<vmem>>, vector<1x32x128xbf16>
    %95 = vector.shape_cast %94 : vector<1x32x128xbf16> to vector<32x128xbf16>
    %96 = arith.extf %95 : vector<32x128xbf16> to vector<32x128xf32>
    %97 = vector.broadcast %93 : f32 to vector<32x128xf32>
    %98 = arith.mulf %97, %96 : vector<32x128xf32>
    %99 = arith.addf %86, %98 : vector<32x128xf32>
    %c7_49 = arith.constant 7 : index
    %c0_50 = arith.constant 0 : index
    %c0_51 = arith.constant 0 : index
    %100 = vector.load %arg4[%c7_49, %c0_50, %c0_51] : memref<8x1x128xbf16, #tpu.memory_space<vmem>>, vector<1x1x128xbf16>
    %101 = vector.shape_cast %100 : vector<1x1x128xbf16> to vector<1x128xbf16>
    %102 = arith.extf %101 : vector<1x128xbf16> to vector<1x128xf32>
    %103 = vector.broadcast %93 : f32 to vector<1x128xf32>
    %104 = arith.mulf %103, %102 : vector<1x128xf32>
    %105 = arith.addf %92, %104 : vector<1x128xf32>
    %c0_52 = arith.constant 0 : index
    %c0_53 = arith.constant 0 : index
    %106 = vector.load %arg2[%c0_52, %c0_53] : memref<8x32xf32, #tpu.memory_space<vmem>>, vector<8x32xf32>
    %cst = arith.constant dense<0.000000e+00> : vector<8x128xf32>
    %107 = tpu.matmul %106, %99, %cst {dimension_numbers = #tpu.dot_dimension_numbers<[1], [0], [0], [1], [0, 0, 1, 1], [], []>} : vector<8x32xf32>, vector<32x128xf32>, vector<8x128xf32> -> vector<8x128xf32>
    %108 = vector.broadcast %105 : vector<1x128xf32> to vector<8x128xf32>
    %109 = arith.addf %107, %108 : vector<8x128xf32>
    %c0_54 = arith.constant 0 : index
    %c0_55 = arith.constant 0 : index
    %110 = vector.load %arg7[%c0_54, %c0_55] : memref<8x128xf32, #tpu.memory_space<vmem>>, vector<8x128xf32>
    tpu.vector_store %arg7[%c0_54, %c0_55], %109 {strides = array<i32>} : memref<8x128xf32, #tpu.memory_space<vmem>>, vector<8x128xf32>,
    return
  }
  func.func @transform_0(%arg0: i32) -> i32 {
    %c0_i32 = arith.constant 0 : i32
    %c0_i32_0 = arith.constant 0 : i32
    return %c0_i32 : i32
  }
  func.func @transform_1(%arg0: i32) -> (i32, i32) {
    %c0_i32 = arith.constant 0 : i32
    %c0_i32_0 = arith.constant 0 : i32
    %c0_i32_1 = arith.constant 0 : i32
    return %c0_i32, %c0_i32_0 : i32, i32
  }
  func.func @transform_2(%arg0: i32) -> (i32, i32, i32) {
    %c0_i32 = arith.constant 0 : i32
    %c0_i32_0 = arith.constant 0 : i32
    %c0_i32_1 = arith.constant 0 : i32
    return %c0_i32, %c0_i32_0, %arg0 : i32, i32, i32
  }
  func.func @transform_3(%arg0: i32) -> (i32, i32, i32) {
    %c0_i32 = arith.constant 0 : i32
    %c0_i32_0 = arith.constant 0 : i32
    %c0_i32_1 = arith.constant 0 : i32
    return %c0_i32, %c0_i32_0, %arg0 : i32, i32, i32
  }
  func.func @transform_4(%arg0: i32) -> (i32, i32) {
    %c0_i32 = arith.constant 0 : i32
    %c0_i32_0 = arith.constant 0 : i32
    return %c0_i32, %arg0 : i32, i32
  }
  func.func @transform_5(%arg0: i32) -> (i32, i32) {
    %c0_i32 = arith.constant 0 : i32
    %c0_i32_0 = arith.constant 0 : i32
    return %c0_i32, %arg0 : i32, i32
  }
  func.func @transform_6(%arg0: i32) -> (i32, i32) {
    %c0_i32 = arith.constant 0 : i32
    %c0_i32_0 = arith.constant 0 : i32
    return %c0_i32, %arg0 : i32, i32
  }
}

</mosaic_0001>

<llo_original>
// kernel: tpu_custom_call.1
$region0: #{tpu_custom_call.1}
  #allocation0 [shape = 'u32[]', space=smem, size = 0x4, offset = 0x4, fixed_abs, tag = 'smem constant byte address 0x4 - core index']
  #allocation1 [shape = 'u32[144,128]{1,0:T(1,128)}', space=vmem, size = 0x12000, scoped, tag = 'internal scratch']
  %s0 = inlined_call_operand.vmem [shape: f32[8], index: 0, kind: input, shape index: {}]
  %s1 = inlined_call_operand.vmem [shape: f32[8,32], index: 1, kind: input, shape index: {}]
  %s2 = inlined_call_operand.hbm [shape: bf16[8,32,256], index: 2, kind: input, shape index: {}]
  %s3 = inlined_call_operand.vmem [shape: bf16[8,1,256], index: 3, kind: input, shape index: {}]
  %s4 = inlined_call_operand.hbm [shape: f32[32,256], index: 4, kind: input, shape index: {}]
  %s5 = inlined_call_operand.vmem [shape: f32[1,256], index: 5, kind: input, shape index: {}]
  %s6 = inlined_call_operand.hbm [shape: f32[8,256], index: 6, kind: output, shape index: {}]
  %s7 = sld [smem:[#allocation0]]
  $region110: #{tpu_custom_call.1} parent=0
    _
  %s9 = ssub.s32 1, %s7
  %s10 = scalar_select 0, %s9, %s7
  $region1: #{tpu_custom_call.1} parent=0
    #allocation2 [shape = 'u8[512]{0}', space=smem, size = 0x200, scoped, tag = 'input window, operand 0, single buffered']
    #allocation3 [shape = 's32[2]{0}', space=sflag, size = 0x8, scoped, tag = 'scoped memory for tpu_custom_call.1']
    #allocation4 [shape = 's32[2]{0}', space=sflag, size = 0x8, scoped, tag = 'scoped memory for tpu_custom_call.1']
    #allocation5 [shape = 's32[2]{0}', space=sflag, size = 0x8, scoped, tag = 'scoped memory for tpu_custom_call.1']
    #allocation6 [shape = 'u8[131072]{0}', space=vmem, size = 0x20000, scoped, tag = 'input window, operand 2']
    #allocation7 [shape = 'u8[8192]{0}', space=vmem, size = 0x2000, scoped, tag = 'input window, operand 3']
    #allocation8 [shape = 'u8[32768]{0}', space=vmem, size = 0x8000, scoped, tag = 'input window, operand 4']
    #allocation9 [shape = 's32[2]{0}', space=sflag, size = 0x8, scoped, tag = 'scoped memory for tpu_custom_call.1']
    #allocation10 [shape = 'u8[8192]{0}', space=vmem, size = 0x2000, scoped, tag = 'output window, operand 0']
    %11 = vsyncpa [#allocation5], 0
    %12 = vsyncpa [#allocation3], 0
    %s13 = scalar_lea.sflag [#allocation3], 1
    %14 = vsyncpa %s13, 0
    %15 = vsyncpa [#allocation9], 0
    %s16 = scalar_lea.sflag [#allocation9], 1
    %17 = vsyncpa %s16, 0
    %18 = vsyncpa [#allocation4], 0
    %s19 = scalar_lea.sflag [#allocation4], 1
    %20 = vsyncpa %s19, 0
    loop: start=0, step=1, limit=4
    $region2: #{tpu_custom_call.1} parent=1 // loop_pre_header
      _
    $region3: #{tpu_custom_call.1} parent=1 // loop_header
      %s22 = sphi 0, %s26
      %p23 = scmp.ge.s32.totalorder %s22, 4
      %s30 = sphi 0, %s30
      %s32 = sphi 0, %s30
      %s33 = sphi 0, %s32
      %s47 = sphi 0, %s33
      %s51 = sphi 0, %s51
      %s53 = sphi 0, %s51
      %s54 = sphi 0, %s53
      %s68 = sphi 0, %s54
      %s74 = sphi 0, %s76
      %s77 = sphi 0, %s74
      %s78 = sphi 0, %s77
      %s94 = sphi 0, %s78
      %s100 = sphi 0, %s102
      %s103 = sphi 0, %s100
      %s104 = sphi 0, %s103
      %s120 = sphi 0, %s104
      %s126 = sphi 0, %s128
      %s129 = sphi 0, %s126
      %s130 = sphi 0, %s129
      %s146 = sphi 0, %s130
      %s152 = sphi 0, %s154
      %s155 = sphi 0, %s152
      %s156 = sphi 0, %s155
      %s172 = sphi 0, %s156
      %s178 = sphi 0, %s180
      %s181 = sphi 0, %s178
      %s182 = sphi 0, %s181
      %s198 = sphi 0, %s182
    $region4: #{tpu_custom_call.1} parent=1 // loop_header_branch
      %25 = sbr.rel (%p23) target = $region8
    $region5: #{tpu_custom_call.1} parent=1 // loop_body
      %s27 = ssub.s32 %s22, 1
      %s28 = ssub.s32 %s22, 2
      %s29 = sadd.s32 %s22, 1
      %s31 = sadd.s32 %s30, 1
      %p34 = scmp.eq.s32.totalorder %s22, 1
      %p35 = scmp.ne.s32.totalorder %s30, %s32
      %p36 = scmp.eq.s32.totalorder %s22, 0
      %p37 = por %p35, %p36
      %p38 = scmp.ne.s32.totalorder %s30, %s32
      %p39 = scmp.eq.s32.totalorder %s27, 1
      %p40 = por %p38, %p39
      %p41 = scmp.ne.s32.totalorder %s32, %s33
      %p42 = scmp.eq.s32.totalorder %s27, 0
      %p43 = por %p41, %p42
      %p44 = scmp.ne.s32.totalorder %s32, %s33
      %p45 = scmp.eq.s32.totalorder %s28, 1
      %p46 = por %p44, %p45
      %p48 = scmp.ne.s32.totalorder %s33, %s47
      %p49 = scmp.eq.s32.totalorder %s28, 0
      %p50 = por %p48, %p49
      %s52 = sadd.s32 %s51, 1
      %p55 = scmp.eq.s32.totalorder %s22, 1
      %p56 = scmp.ne.s32.totalorder %s51, %s53
      %p57 = scmp.eq.s32.totalorder %s22, 0
      %p58 = por %p56, %p57
      %p59 = scmp.ne.s32.totalorder %s51, %s53
      %p60 = scmp.eq.s32.totalorder %s27, 1
      %p61 = por %p59, %p60
      %p62 = scmp.ne.s32.totalorder %s53, %s54
      %p63 = scmp.eq.s32.totalorder %s27, 0
      %p64 = por %p62, %p63
      %p65 = scmp.ne.s32.totalorder %s53, %s54
      %p66 = scmp.eq.s32.totalorder %s28, 1
      %p67 = por %p65, %p66
      %p69 = scmp.ne.s32.totalorder %s54, %s68
      %p70 = scmp.eq.s32.totalorder %s28, 0
      %p71 = por %p69, %p70
      %s72 = ssub.s32 %s22, %s29
      %p73 = scmp.eq.s32.totalorder %s72, 0
      %s75 = sadd.s32 %s74, 1
      %s76 = scalar_select %p73, %s74, %s75
      %p79 = pneg %p73
      %p80 = scmp.eq.s32.totalorder %s22, 1
      %p81 = por %p79, %p80
      %p82 = scmp.ne.s32.totalorder %s74, %s77
      %p83 = scmp.eq.s32.totalorder %s22, 0
      %p84 = por %p82, %p83
      %p85 = scmp.ne.s32.totalorder %s74, %s77
      %p86 = scmp.eq.s32.totalorder %s27, 1
      %p87 = por %p85, %p86
      %p88 = scmp.ne.s32.totalorder %s77, %s78
      %p89 = scmp.eq.s32.totalorder %s27, 0
      %p90 = por %p88, %p89
      %p91 = scmp.ne.s32.totalorder %s77, %s78
      %p92 = scmp.eq.s32.totalorder %s28, 1
      %p93 = por %p91, %p92
      %p95 = scmp.ne.s32.totalorder %s78, %s94
      %p96 = scmp.eq.s32.totalorder %s28, 0
      %p97 = por %p95, %p96
      %s98 = ssub.s32 %s22, %s29
      %p99 = scmp.eq.s32.totalorder %s98, 0
      %s101 = sadd.s32 %s100, 1
      %s102 = scalar_select %p99, %s100, %s101
      %p105 = pneg %p99
      %p106 = scmp.eq.s32.totalorder %s22, 1
      %p107 = por %p105, %p106
      %p108 = scmp.ne.s32.totalorder %s100, %s103
      %p109 = scmp.eq.s32.totalorder %s22, 0
      %p110 = por %p108, %p109
      %p111 = scmp.ne.s32.totalorder %s100, %s103
      %p112 = scmp.eq.s32.totalorder %s27, 1
      %p113 = por %p111, %p112
      %p114 = scmp.ne.s32.totalorder %s103, %s104
      %p115 = scmp.eq.s32.totalorder %s27, 0
      %p116 = por %p114, %p115
      %p117 = scmp.ne.s32.totalorder %s103, %s104
      %p118 = scmp.eq.s32.totalorder %s28, 1
      %p119 = por %p117, %p118
      %p121 = scmp.ne.s32.totalorder %s104, %s120
      %p122 = scmp.eq.s32.totalorder %s28, 0
      %p123 = por %p121, %p122
      %s124 = ssub.s32 %s22, %s29
      %p125 = scmp.eq.s32.totalorder %s124, 0
      %s127 = sadd.s32 %s126, 1
      %s128 = scalar_select %p125, %s126, %s127
      %p131 = pneg %p125
      %p132 = scmp.eq.s32.totalorder %s22, 1
      %p133 = por %p131, %p132
      %p134 = scmp.ne.s32.totalorder %s126, %s129
      %p135 = scmp.eq.s32.totalorder %s22, 0
      %p136 = por %p134, %p135
      %p137 = scmp.ne.s32.totalorder %s126, %s129
      %p138 = scmp.eq.s32.totalorder %s27, 1
      %p139 = por %p137, %p138
      %p140 = scmp.ne.s32.totalorder %s129, %s130
      %p141 = scmp.eq.s32.totalorder %s27, 0
      %p142 = por %p140, %p141
      %p143 = scmp.ne.s32.totalorder %s129, %s130
      %p144 = scmp.eq.s32.totalorder %s28, 1
      %p145 = por %p143, %p144
      %p147 = scmp.ne.s32.totalorder %s130, %s146
      %p148 = scmp.eq.s32.totalorder %s28, 0
      %p149 = por %p147, %p148
      %s150 = ssub.s32 %s22, %s29
      %p151 = scmp.eq.s32.totalorder %s150, 0
      %s153 = sadd.s32 %s152, 1
      %s154 = scalar_select %p151, %s152, %s153
      %p157 = pneg %p151
      %p158 = scmp.eq.s32.totalorder %s22, 1
      %p159 = por %p157, %p158
      %p160 = scmp.ne.s32.totalorder %s152, %s155
      %p161 = scmp.eq.s32.totalorder %s22, 0
      %p162 = por %p160, %p161
      %p163 = scmp.ne.s32.totalorder %s152, %s155
      %p164 = scmp.eq.s32.totalorder %s27, 1
      %p165 = por %p163, %p164
      %p166 = scmp.ne.s32.totalorder %s155, %s156
      %p167 = scmp.eq.s32.totalorder %s27, 0
      %p168 = por %p166, %p167
      %p169 = scmp.ne.s32.totalorder %s155, %s156
      %p170 = scmp.eq.s32.totalorder %s28, 1
      %p171 = por %p169, %p170
      %p173 = scmp.ne.s32.totalorder %s156, %s172
      %p174 = scmp.eq.s32.totalorder %s28, 0
      %p175 = por %p173, %p174
      %s176 = ssub.s32 %s22, %s29
      %p177 = scmp.eq.s32.totalorder %s176, 0
      %s179 = sadd.s32 %s178, 1
      %s180 = scalar_select %p177, %s178, %s179
      %p183 = pneg %p177
      %p184 = scmp.eq.s32.totalorder %s22, 1
      %p185 = por %p183, %p184
      %p186 = scmp.ne.s32.totalorder %s178, %s181
      %p187 = scmp.eq.s32.totalorder %s22, 0
      %p188 = por %p186, %p187
      %p189 = scmp.ne.s32.totalorder %s178, %s181
      %p190 = scmp.eq.s32.totalorder %s27, 1
      %p191 = por %p189, %p190
      %p192 = scmp.ne.s32.totalorder %s181, %s182
      %p193 = scmp.eq.s32.totalorder %s27, 0
      %p194 = por %p192, %p193
      %p195 = scmp.ne.s32.totalorder %s181, %s182
      %p196 = scmp.eq.s32.totalorder %s28, 1
      %p197 = por %p195, %p196
      %p199 = scmp.ne.s32.totalorder %s182, %s198
      %p200 = scmp.eq.s32.totalorder %s28, 0
      %p201 = por %p199, %p200
      %p202 = scmp.le.s32.totalorder 1, %s22
      %p203 = scmp.lt.s32.totalorder %s22, 3
      %p204 = pnand %p202, %p203
      %p205 = pneg %p204
      // Predicated region
      $region9: #{tpu_custom_call.1} parent=5 // pred_check
        _
      $region10: #{tpu_custom_call.1} parent=5 // pred_check_branch
        %207 = sbr.rel (%p204) target = $region12
      $region11: #{tpu_custom_call.1} parent=5 // pred_region
        %s208 = ssub.s32 %s22, 1
        // Predicated region
        $region13: #{tpu_custom_call.1} parent=11 // pred_check
          %p209 = pneg %p43
        $region14: #{tpu_custom_call.1} parent=11 // pred_check_branch
          %211 = sbr.rel (%p209) target = $region16
        $region15: #{tpu_custom_call.1} parent=11 // pred_region
          %s213 = ssub.s32 16, 16
          %214 = vsyncadd [#allocation5], %s213
          %s216 = sshll.u32 %s0, 4
          %s217 = int_to_ptr.vmem [resolvable:$true] %s216
          %219 = dma.vmem_to_smem %s217, 16, [#allocation2], [#allocation5]
        $region16: #{tpu_custom_call.1} parent=11 // pred_fallthru
          _
        // Predicated region
        $region17: #{tpu_custom_call.1} parent=11 // pred_check
          %p220 = pneg %p64
        $region18: #{tpu_custom_call.1} parent=11 // pred_check_branch
          %222 = sbr.rel (%p220) target = $region20
        $region19: #{tpu_custom_call.1} parent=11 // pred_region
          _
        $region20: #{tpu_custom_call.1} parent=11 // pred_fallthru
          _
      $region12: #{tpu_custom_call.1} parent=5 // pred_fallthru
        _
      %p223 = scmp.lt.s32.totalorder %s22, 2
      // Predicated region
      $region21: #{tpu_custom_call.1} parent=5 // pred_check
        %p224 = pneg %p223
      $region22: #{tpu_custom_call.1} parent=5 // pred_check_branch
        %226 = sbr.rel (%p224) target = $region24
      $region23: #{tpu_custom_call.1} parent=5 // pred_region
        // Predicated region
        $region25: #{tpu_custom_call.1} parent=23 // pred_check
          %p227 = pneg %p84
        $region26: #{tpu_custom_call.1} parent=23 // pred_check_branch
          %229 = sbr.rel (%p227) target = $region28
        $region27: #{tpu_custom_call.1} parent=23 // pred_region
          %s230 = sand.u32 %s74, 1
          %s231 = scalar_lea.sflag [#allocation3], %s230
          %s232 = sand.u32 %s74, 1
          %s233 = smul.addr %s232, 128
          %s234 = scalar_lea.vmem [#allocation6], %s233
          %s236 = ssub.s32 2048, 2048
          %237 = vsyncadd %s231, %s236
          %s238 = smul.addr %s22, 64
          %s239 = scalar_lea.hbm %s2, %s238
          %s240 = sshll.u32 %s234, 4
          %s241 = int_to_ptr.vmem [resolvable:$true] %s240
          %246 = dma.hbm_to_vmem [thread:$0]  %s239, 2048, %s241, %s231, 128, 64, 4
        $region28: #{tpu_custom_call.1} parent=23 // pred_fallthru
          _
        // Predicated region
        $region29: #{tpu_custom_call.1} parent=23 // pred_check
          %p247 = pneg %p110
        $region30: #{tpu_custom_call.1} parent=23 // pred_check_branch
          %249 = sbr.rel (%p247) target = $region32
        $region31: #{tpu_custom_call.1} parent=23 // pred_region
          %s250 = sand.u32 %s100, 1
          %s251 = sand.u32 %s100, 1
          %s252 = smul.addr %s251, 8
          %s253 = scalar_lea.vmem [#allocation7], %s252
          %s254 = scalar_lea.vmem %s3, %s22
          // Predicated region
          $region33: #{tpu_custom_call.1} parent=31 // pred_check
            _
          $region34: #{tpu_custom_call.1} parent=31 // pred_check_branch
            %256 = sbr.rel (0) target = $region36
          $region35: #{tpu_custom_call.1} parent=31 // pred_region
            // Predicated region
            $region37: #{tpu_custom_call.1} parent=35 // pred_check
              _
            $region38: #{tpu_custom_call.1} parent=35 // pred_check_branch
              %258 = sbr.rel target = $region40
            $region39: #{tpu_custom_call.1} parent=35 // pred_region
              // Predicated region
              $region52: #{tpu_custom_call.1} parent=39 // pred_check
                _
              $region53: #{tpu_custom_call.1} parent=39 // pred_check_branch
                %288 = sbr.rel (0) target = $region55
              $region54: #{tpu_custom_call.1} parent=39 // pred_region
                loop: start=0, step=1, limit=1
                $region56: #{tpu_custom_call.1} parent=54 // loop_pre_header
                  _
                $region57: #{tpu_custom_call.1} parent=54 // loop_header
                  %s290 = sphi 0, %s294
                  %p291 = scmp.ge.s32.totalorder %s290, 1
                  %s295 = sphi %s254, %s254
                  %s296 = sphi %s253, %s253
                $region58: #{tpu_custom_call.1} parent=54 // loop_header_branch
                  %293 = sbr.rel (%p291) target = $region62
                $region59: #{tpu_custom_call.1} parent=54 // loop_body
                  _
                $region60: #{tpu_custom_call.1} parent=54 // loop_footer
                  %s294 = sadd.s32 1, %s290
                $region61: #{tpu_custom_call.1} parent=54 // loop_footer_branch
                  %289 = sbr.rel target = $region57
                $region62: #{tpu_custom_call.1} parent=54 // loop_exit
                  _
                %s298 = ssub.s32 2, 1
                loop: start=0, step=1, limit=1
                $region63: #{tpu_custom_call.1} parent=54 // loop_pre_header
                  _
                $region64: #{tpu_custom_call.1} parent=54 // loop_header
                  %s300 = sphi 0, %s304
                  %p301 = scmp.ge.s32.totalorder %s300, 1
                  %s305 = sphi %s254, %s254
                  %s306 = sphi %s253, %s253
                $region65: #{tpu_custom_call.1} parent=54 // loop_header_branch
                  %303 = sbr.rel (%p301) target = $region69
                $region66: #{tpu_custom_call.1} parent=54 // loop_body
                  %v307 = vld [vmem:[%s305] sm:%s298]
                  %308 = vst [vmem:[%s306] sm:%s298] %v307
                  %v309 = vld [vmem:[%s305 + $0x2] sm:%s298]
                  %310 = vst [vmem:[%s306 + $0x1] sm:%s298] %v309
                  %v311 = vld [vmem:[%s305 + $0x4] sm:%s298]
                  %312 = vst [vmem:[%s306 + $0x2] sm:%s298] %v311
                  %v313 = vld [vmem:[%s305 + $0x6] sm:%s298]
                  %314 = vst [vmem:[%s306 + $0x3] sm:%s298] %v313
                  %v315 = vld [vmem:[%s305 + $0x8] sm:%s298]
                  %316 = vst [vmem:[%s306 + $0x4] sm:%s298] %v315
                  %v317 = vld [vmem:[%s305 + $0xa] sm:%s298]
                  %318 = vst [vmem:[%s306 + $0x5] sm:%s298] %v317
                  %v319 = vld [vmem:[%s305 + $0xc] sm:%s298]
                  %320 = vst [vmem:[%s306 + $0x6] sm:%s298] %v319
                  %v321 = vld [vmem:[%s305 + $0xe] sm:%s298]
                  %322 = vst [vmem:[%s306 + $0x7] sm:%s298] %v321
                $region67: #{tpu_custom_call.1} parent=54 // loop_footer
                  %s304 = sadd.s32 1, %s300
                $region68: #{tpu_custom_call.1} parent=54 // loop_footer_branch
                  %299 = sbr.rel target = $region64
                $region69: #{tpu_custom_call.1} parent=54 // loop_exit
                  _
              $region55: #{tpu_custom_call.1} parent=39 // pred_fallthru
                _
            $region40: #{tpu_custom_call.1} parent=35 // pred_fallthru
              _
            // Predicated region
            $region41: #{tpu_custom_call.1} parent=35 // pred_check
              _
            $region42: #{tpu_custom_call.1} parent=35 // pred_check_branch
              %260 = sbr.rel (0) target = $region44
            $region43: #{tpu_custom_call.1} parent=35 // pred_region
              %s262 = ssub.s32 2, 1
              loop: start=0, step=1, limit=1
              $region45: #{tpu_custom_call.1} parent=43 // loop_pre_header
                _
              $region46: #{tpu_custom_call.1} parent=43 // loop_header
                %s264 = sphi 0, %s268
                %p265 = scmp.ge.s32.totalorder %s264, 1
                %s269 = sphi %s254, %s254
                %s270 = sphi %s253, %s253
              $region47: #{tpu_custom_call.1} parent=43 // loop_header_branch
                %267 = sbr.rel (%p265) target = $region51
              $region48: #{tpu_custom_call.1} parent=43 // loop_body
                %v271 = vld [vmem:[%s269] sm:%s262]
                %272 = vst [vmem:[%s270] sm:%s262] %v271
                %v273 = vld [vmem:[%s269 + $0x2] sm:%s262]
                %274 = vst [vmem:[%s270 + $0x1] sm:%s262] %v273
                %v275 = vld [vmem:[%s269 + $0x4] sm:%s262]
                %276 = vst [vmem:[%s270 + $0x2] sm:%s262] %v275
                %v277 = vld [vmem:[%s269 + $0x6] sm:%s262]
                %278 = vst [vmem:[%s270 + $0x3] sm:%s262] %v277
                %v279 = vld [vmem:[%s269 + $0x8] sm:%s262]
                %280 = vst [vmem:[%s270 + $0x4] sm:%s262] %v279
                %v281 = vld [vmem:[%s269 + $0xa] sm:%s262]
                %282 = vst [vmem:[%s270 + $0x5] sm:%s262] %v281
                %v283 = vld [vmem:[%s269 + $0xc] sm:%s262]
                %284 = vst [vmem:[%s270 + $0x6] sm:%s262] %v283
                %v285 = vld [vmem:[%s269 + $0xe] sm:%s262]
                %286 = vst [vmem:[%s270 + $0x7] sm:%s262] %v285
              $region49: #{tpu_custom_call.1} parent=43 // loop_footer
                %s268 = sadd.s32 1, %s264
              $region50: #{tpu_custom_call.1} parent=43 // loop_footer_branch
                %263 = sbr.rel target = $region46
              $region51: #{tpu_custom_call.1} parent=43 // loop_exit
                _
            $region44: #{tpu_custom_call.1} parent=35 // pred_fallthru
              _
          $region36: #{tpu_custom_call.1} parent=31 // pred_fallthru
            _
          %323 = vnop
        $region32: #{tpu_custom_call.1} parent=23 // pred_fallthru
          _
        // Predicated region
        $region70: #{tpu_custom_call.1} parent=23 // pred_check
          %p324 = pneg %p136
        $region71: #{tpu_custom_call.1} parent=23 // pred_check_branch
          %326 = sbr.rel (%p324) target = $region73
        $region72: #{tpu_custom_call.1} parent=23 // pred_region
          %s327 = sand.u32 %s126, 1
          %s328 = scalar_lea.sflag [#allocation9], %s327
          %s329 = sand.u32 %s126, 1
          %s330 = smul.addr %s329, 32
          %s331 = scalar_lea.vmem [#allocation8], %s330
          %s333 = ssub.s32 512, 512
          %334 = vsyncadd %s328, %s333
          %s335 = smul.addr %s22, 128
          %s336 = scalar_lea.hbm %s4, %s335
          %s337 = sshll.u32 %s331, 4
          %s338 = int_to_ptr.vmem [resolvable:$true] %s337
          %343 = dma.hbm_to_vmem [thread:$0]  %s336, 512, %s338, %s328, 256, 128, 8
        $region73: #{tpu_custom_call.1} parent=23 // pred_fallthru
          _
        // Predicated region
        $region74: #{tpu_custom_call.1} parent=23 // pred_check
          %p344 = pneg %p162
        $region75: #{tpu_custom_call.1} parent=23 // pred_check_branch
          %346 = sbr.rel (%p344) target = $region77
        $region76: #{tpu_custom_call.1} parent=23 // pred_region
          %p347 = scmp.lt.s32.totalorder %s22, 1
          %s348 = scalar_select %p347, %s22, 1
          %s349 = scalar_lea.vmem %s5, %s348
        $region77: #{tpu_custom_call.1} parent=23 // pred_fallthru
          _
      $region24: #{tpu_custom_call.1} parent=5 // pred_fallthru
        _
      %p350 = scmp.le.s32.totalorder 1, %s22
      %p351 = scmp.lt.s32.totalorder %s22, 3
      %p352 = pnand %p350, %p351
      %p353 = pneg %p352
      // Predicated region
      $region78: #{tpu_custom_call.1} parent=5 // pred_check
        _
      $region79: #{tpu_custom_call.1} parent=5 // pred_check_branch
        %355 = sbr.rel (%p352) target = $region81
      $region80: #{tpu_custom_call.1} parent=5 // pred_region
        %s356 = ssub.s32 %s22, 1
        // Predicated region
        $region82: #{tpu_custom_call.1} parent=80 // pred_check
          %p357 = pneg %p43
        $region83: #{tpu_custom_call.1} parent=80 // pred_check_branch
          %359 = sbr.rel (%p357) target = $region85
        $region84: #{tpu_custom_call.1} parent=80 // pred_region
          %360 = dma.done [#allocation5], 16
        $region85: #{tpu_custom_call.1} parent=80 // pred_fallthru
          _
        %s361 = sand.u32 %s77, 1
        %s362 = scalar_lea.sflag [#allocation3], %s361
        %s363 = sand.u32 %s77, 1
        %s364 = smul.addr %s363, 128
        %s365 = scalar_lea.vmem [#allocation6], %s364
        // Predicated region
        $region86: #{tpu_custom_call.1} parent=80 // pred_check
          %p366 = pneg %p90
        $region87: #{tpu_custom_call.1} parent=80 // pred_check_branch
          %368 = sbr.rel (%p366) target = $region89
        $region88: #{tpu_custom_call.1} parent=80 // pred_region
          %369 = dma.done %s362, 2048
        $region89: #{tpu_custom_call.1} parent=80 // pred_fallthru
          _
        %s370 = sand.u32 %s103, 1
        %s371 = sand.u32 %s103, 1
        %s372 = smul.addr %s371, 8
        %s373 = scalar_lea.vmem [#allocation7], %s372
        // Predicated region
        $region90: #{tpu_custom_call.1} parent=80 // pred_check
          %p374 = pneg %p116
        $region91: #{tpu_custom_call.1} parent=80 // pred_check_branch
          %376 = sbr.rel (%p374) target = $region93
        $region92: #{tpu_custom_call.1} parent=80 // pred_region
          _
        $region93: #{tpu_custom_call.1} parent=80 // pred_fallthru
          _
        %s377 = sand.u32 %s129, 1
        %s378 = scalar_lea.sflag [#allocation9], %s377
        %s379 = sand.u32 %s129, 1
        %s380 = smul.addr %s379, 32
        %s381 = scalar_lea.vmem [#allocation8], %s380
        // Predicated region
        $region94: #{tpu_custom_call.1} parent=80 // pred_check
          %p382 = pneg %p142
        $region95: #{tpu_custom_call.1} parent=80 // pred_check_branch
          %384 = sbr.rel (%p382) target = $region97
        $region96: #{tpu_custom_call.1} parent=80 // pred_region
          %385 = dma.done %s378, 512
        $region97: #{tpu_custom_call.1} parent=80 // pred_fallthru
          _
        %386 = sfence
        %p387 = pneg %p43
        %p388 = pneg %p40
        %p389 = pneg %p64
        %p390 = pneg %p61
        %s391 = sand.u32 %s77, 1
        %s392 = scalar_lea.sflag [#allocation3], %s391
        %s393 = sand.u32 %s77, 1
        %s394 = smul.addr %s393, 128
        %s395 = scalar_lea.vmem [#allocation6], %s394
        %p396 = pneg %p90
        %p397 = pneg %p87
        %s398 = sand.u32 %s103, 1
        %s399 = sand.u32 %s103, 1
        %s400 = smul.addr %s399, 8
        %s401 = scalar_lea.vmem [#allocation7], %s400
        %p402 = pneg %p116
        %p403 = pneg %p113
        %s404 = sand.u32 %s129, 1
        %s405 = scalar_lea.sflag [#allocation9], %s404
        %s406 = sand.u32 %s129, 1
        %s407 = smul.addr %s406, 32
        %s408 = scalar_lea.vmem [#allocation8], %s407
        %p409 = pneg %p142
        %p410 = pneg %p139
        %p411 = scmp.lt.s32.totalorder %s27, 1
        %s412 = scalar_select %p411, %s27, 1
        %s413 = scalar_lea.vmem %s5, %s412
        %p414 = pneg %p168
        %p415 = pneg %p165
        %p416 = pneg %p194
        %p417 = pneg %p191
        %s418 = sand.u32 %s181, 1
        %s419 = scalar_lea.sflag [#allocation4], %s418
        %s420 = sand.u32 %s181, 1
        %s421 = smul.addr %s420, 8
        %s422 = scalar_lea.vmem [#allocation10], %s421
        %p423 = scmp.lt.s32.totalorder %s27, 1
        %s424 = scalar_select %p423, %s27, 1
        %s425 = scalar_lea.vmem %s5, %s424
        %v426 = vld [vmem:[%s381] sm:$0xff]
        %v427 = vld [vmem:[%s381 + $0x8] sm:$0xff]
        %v428 = vld [vmem:[%s381 + $0x10] sm:$0xff]
        %v429 = vld [vmem:[%s381 + $0x18] sm:$0xff]
        %v430 = vld [vmem:[%s425] sm:$0x1]
        %s431 = sld [smem:[#allocation2]]
        %v432 = vld [vmem:[%s365] sm:$0xf]
        %v433 = vld [vmem:[%s365 + $0x4] sm:$0xf]
        %v434 = vld [vmem:[%s365 + $0x8] sm:$0xf]
        %v435 = vld [vmem:[%s365 + $0xc] sm:$0xf]
        %v436 = vunpack.c.l.bf16 %v432
        %v437 = vunpack.c.l.bf16 %v433
        %v438 = vunpack.c.l.bf16 %v434
        %v439 = vunpack.c.l.bf16 %v435
        %v440 = vstv %s431
        %v441 = vmul.f32 %v440, %v436
        %v442 = vmul.f32 %v440, %v437
        %v443 = vmul.f32 %v440, %v438
        %v444 = vmul.f32 %v440, %v439
        %v445 = vadd.f32 %v426, %v441
        %v446 = vadd.f32 %v427, %v442
        %v447 = vadd.f32 %v428, %v443
        %v448 = vadd.f32 %v429, %v444
        %v449 = vld [vmem:[%s373] sm:$0x1]
        %v450 = vunpack.c.l.bf16 %v449
        %v451 = vmul.f32 %v440, %v450
        %v452 = vadd.f32 %v430, %v451
        %s453 = sld [smem:[#allocation2 + $0x1]]
        %s454 = scalar_lea.vmem %s365, 16 [#allocation6]
        %v455 = vld [vmem:[%s454] sm:$0xf]
        %v456 = vld [vmem:[%s454 + $0x4] sm:$0xf]
        %v457 = vld [vmem:[%s454 + $0x8] sm:$0xf]
        %v458 = vld [vmem:[%s454 + $0xc] sm:$0xf]
        %v459 = vunpack.c.l.bf16 %v455
        %v460 = vunpack.c.l.bf16 %v456
        %v461 = vunpack.c.l.bf16 %v457
        %v462 = vunpack.c.l.bf16 %v458
        %v463 = vstv %s453
        %v464 = vmul.f32 %v463, %v459
        %v465 = vmul.f32 %v463, %v460
        %v466 = vmul.f32 %v463, %v461
        %v467 = vmul.f32 %v463, %v462
        %v468 = vadd.f32 %v445, %v464
        %v469 = vadd.f32 %v446, %v465
        %v470 = vadd.f32 %v447, %v466
        %v471 = vadd.f32 %v448, %v467
        %s472 = scalar_lea.vmem %s373, 1 [#allocation7]
        %v473 = vld [vmem:[%s472] sm:$0x1]
        %v474 = vunpack.c.l.bf16 %v473
        %v475 = vmul.f32 %v463, %v474
        %v476 = vadd.f32 %v452, %v475
        %s477 = sld [smem:[#allocation2 + $0x2]]
        %s478 = scalar_lea.vmem %s365, 32 [#allocation6]
        %v479 = vld [vmem:[%s478] sm:$0xf]
        %v480 = vld [vmem:[%s478 + $0x4] sm:$0xf]
        %v481 = vld [vmem:[%s478 + $0x8] sm:$0xf]
        %v482 = vld [vmem:[%s478 + $0xc] sm:$0xf]
        %v483 = vunpack.c.l.bf16 %v479
        %v484 = vunpack.c.l.bf16 %v480
        %v485 = vunpack.c.l.bf16 %v481
        %v486 = vunpack.c.l.bf16 %v482
        %v487 = vstv %s477
        %v488 = vmul.f32 %v487, %v483
        %v489 = vmul.f32 %v487, %v484
        %v490 = vmul.f32 %v487, %v485
        %v491 = vmul.f32 %v487, %v486
        %v492 = vadd.f32 %v468, %v488
        %v493 = vadd.f32 %v469, %v489
        %v494 = vadd.f32 %v470, %v490
        %v495 = vadd.f32 %v471, %v491
        %s496 = scalar_lea.vmem %s373, 2 [#allocation7]
        %v497 = vld [vmem:[%s496] sm:$0x1]
        %v498 = vunpack.c.l.bf16 %v497
        %v499 = vmul.f32 %v487, %v498
        %v500 = vadd.f32 %v476, %v499
        %s501 = sld [smem:[#allocation2 + $0x3]]
        %s502 = scalar_lea.vmem %s365, 48 [#allocation6]
        %v503 = vld [vmem:[%s502] sm:$0xf]
        %v504 = vld [vmem:[%s502 + $0x4] sm:$0xf]
        %v505 = vld [vmem:[%s502 + $0x8] sm:$0xf]
        %v506 = vld [vmem:[%s502 + $0xc] sm:$0xf]
        %v507 = vunpack.c.l.bf16 %v503
        %v508 = vunpack.c.l.bf16 %v504
        %v509 = vunpack.c.l.bf16 %v505
        %v510 = vunpack.c.l.bf16 %v506
        %v511 = vstv %s501
        %v512 = vmul.f32 %v511, %v507
        %v513 = vmul.f32 %v511, %v508
        %v514 = vmul.f32 %v511, %v509
        %v515 = vmul.f32 %v511, %v510
        %v516 = vadd.f32 %v492, %v512
        %v517 = vadd.f32 %v493, %v513
        %v518 = vadd.f32 %v494, %v514
        %v519 = vadd.f32 %v495, %v515
        %s520 = scalar_lea.vmem %s373, 3 [#allocation7]
        %v521 = vld [vmem:[%s520] sm:$0x1]
        %v522 = vunpack.c.l.bf16 %v521
        %v523 = vmul.f32 %v511, %v522
        %v524 = vadd.f32 %v500, %v523
        %s525 = sld [smem:[#allocation2 + $0x4]]
        %s526 = scalar_lea.vmem %s365, 64 [#allocation6]
        %v527 = vld [vmem:[%s526] sm:$0xf]
        %v528 = vld [vmem:[%s526 + $0x4] sm:$0xf]
        %v529 = vld [vmem:[%s526 + $0x8] sm:$0xf]
        %v530 = vld [vmem:[%s526 + $0xc] sm:$0xf]
        %v531 = vunpack.c.l.bf16 %v527
        %v532 = vunpack.c.l.bf16 %v528
        %v533 = vunpack.c.l.bf16 %v529
        %v534 = vunpack.c.l.bf16 %v530
        %v535 = vstv %s525
        %v536 = vmul.f32 %v535, %v531
        %v537 = vmul.f32 %v535, %v532
        %v538 = vmul.f32 %v535, %v533
        %v539 = vmul.f32 %v535, %v534
        %v540 = vadd.f32 %v516, %v536
        %v541 = vadd.f32 %v517, %v537
        %v542 = vadd.f32 %v518, %v538
        %v543 = vadd.f32 %v519, %v539
        %s544 = scalar_lea.vmem %s373, 4 [#allocation7]
        %v545 = vld [vmem:[%s544] sm:$0x1]
        %v546 = vunpack.c.l.bf16 %v545
        %v547 = vmul.f32 %v535, %v546
        %v548 = vadd.f32 %v524, %v547
        %s549 = sld [smem:[#allocation2 + $0x5]]
        %s550 = scalar_lea.vmem %s365, 80 [#allocation6]
        %v551 = vld [vmem:[%s550] sm:$0xf]
        %v552 = vld [vmem:[%s550 + $0x4] sm:$0xf]
        %v553 = vld [vmem:[%s550 + $0x8] sm:$0xf]
        %v554 = vld [vmem:[%s550 + $0xc] sm:$0xf]
        %v555 = vunpack.c.l.bf16 %v551
        %v556 = vunpack.c.l.bf16 %v552
        %v557 = vunpack.c.l.bf16 %v553
        %v558 = vunpack.c.l.bf16 %v554
        %v559 = vstv %s549
        %v560 = vmul.f32 %v559, %v555
        %v561 = vmul.f32 %v559, %v556
        %v562 = vmul.f32 %v559, %v557
        %v563 = vmul.f32 %v559, %v558
        %v564 = vadd.f32 %v540, %v560
        %v565 = vadd.f32 %v541, %v561
        %v566 = vadd.f32 %v542, %v562
        %v567 = vadd.f32 %v543, %v563
        %s568 = scalar_lea.vmem %s373, 5 [#allocation7]
        %v569 = vld [vmem:[%s568] sm:$0x1]
        %v570 = vunpack.c.l.bf16 %v569
        %v571 = vmul.f32 %v559, %v570
        %v572 = vadd.f32 %v548, %v571
        %s573 = sld [smem:[#allocation2 + $0x6]]
        %s574 = scalar_lea.vmem %s365, 96 [#allocation6]
        %v575 = vld [vmem:[%s574] sm:$0xf]
        %v576 = vld [vmem:[%s574 + $0x4] sm:$0xf]
        %v577 = vld [vmem:[%s574 + $0x8] sm:$0xf]
        %v578 = vld [vmem:[%s574 + $0xc] sm:$0xf]
        %v579 = vunpack.c.l.bf16 %v575
        %v580 = vunpack.c.l.bf16 %v576
        %v581 = vunpack.c.l.bf16 %v577
        %v582 = vunpack.c.l.bf16 %v578
        %v583 = vstv %s573
        %v584 = vmul.f32 %v583, %v579
        %v585 = vmul.f32 %v583, %v580
        %v586 = vmul.f32 %v583, %v581
        %v587 = vmul.f32 %v583, %v582
        %v588 = vadd.f32 %v564, %v584
        %v589 = vadd.f32 %v565, %v585
        %v590 = vadd.f32 %v566, %v586
        %v591 = vadd.f32 %v567, %v587
        %s592 = scalar_lea.vmem %s373, 6 [#allocation7]
        %v593 = vld [vmem:[%s592] sm:$0x1]
        %v594 = vunpack.c.l.bf16 %v593
        %v595 = vmul.f32 %v583, %v594
        %v596 = vadd.f32 %v572, %v595
        %s597 = sld [smem:[#allocation2 + $0x7]]
        %s598 = scalar_lea.vmem %s365, 112 [#allocation6]
        %v599 = vld [vmem:[%s598] sm:$0xf]
        %v600 = vld [vmem:[%s598 + $0x4] sm:$0xf]
        %v601 = vld [vmem:[%s598 + $0x8] sm:$0xf]
        %v602 = vld [vmem:[%s598 + $0xc] sm:$0xf]
        %v603 = vunpack.c.l.bf16 %v599
        %v604 = vunpack.c.l.bf16 %v600
        %v605 = vunpack.c.l.bf16 %v601
        %v606 = vunpack.c.l.bf16 %v602
        %v607 = vstv %s597
        %v608 = vmul.f32 %v607, %v603
        %v609 = vmul.f32 %v607, %v604
        %v610 = vmul.f32 %v607, %v605
        %v611 = vmul.f32 %v607, %v606
        %v612 = vadd.f32 %v588, %v608
        %v613 = vadd.f32 %v589, %v609
        %v614 = vadd.f32 %v590, %v610
        %v615 = vadd.f32 %v591, %v611
        %s616 = scalar_lea.vmem %s373, 7 [#allocation7]
        %v617 = vld [vmem:[%s616] sm:$0x1]
        %v618 = vunpack.c.l.bf16 %v617
        %v619 = vmul.f32 %v607, %v618
        %v620 = vadd.f32 %v596, %v619
        %v621 = vld [vmem:[%s1] sm:$0xff]
        %v623 = vlaneseq
        %v624 = vshrl.u32 %v623, 7
        %v625 = vsub.s32 0, %v624
        %v626 = vrot.slane %v620, %v625
        %vm628 = vcmask 261120
        %v630 = vsel %vm628, %v621, 0
        %632 = vmatprep.subr.mxu0 0.0
        %633 = vmatpush1.msra.mxu0 0.0
        %634 = vmatprep.subr.mxu0 0.0
        %635 = vmatpush1.msra.mxu0 0.0
        %636 = vmatprep.subr.mxu0 0.0
        %637 = vmatpush1.msra.mxu0 0.0
        %638 = vmatprep.subr.mxu0 0.0
        %639 = vmatpush1.msra.mxu0 0.0
        %640 = vmatprep.subr.mxu0 0.0
        %641 = vmatpush1.msra.mxu0 0.0
        %642 = vmatprep.subr.mxu0 0.0
        %643 = vmatpush1.msra.mxu0 0.0
        %644 = vmatprep.subr.mxu0 0.0
        %645 = vmatpush1.msra.mxu0 0.0
        %646 = vmatprep.subr.mxu0 0.0
        %647 = vmatpush1.msra.mxu0 0.0
        %648 = vmatprep.subr.mxu0 0.0
        %649 = vmatpush1.msra.mxu0 0.0
        %650 = vmatprep.subr.mxu0 0.0
        %651 = vmatpush1.msra.mxu0 0.0
        %652 = vmatprep.subr.mxu0 0.0
        %653 = vmatpush1.msra.mxu0 0.0
        %654 = vmatprep.subr.mxu0 0.0
        %655 = vmatpush1.msra.mxu0 0.0
        %656 = vmatprep.subr.mxu0 0.0
        %657 = vmatpush1.msra.mxu0 %v615
        %658 = vmatprep.subr.mxu0 0.0
        %659 = vmatpush1.msra.mxu0 %v614
        %660 = vmatprep.subr.mxu0 0.0
        %661 = vmatpush1.msra.mxu0 %v613
        %662 = vmatprep.subr.mxu0 0.0
        %663 = vmatpush1.msra.mxu0 %v612
        %664 = vmatprep.subr.mxu0 0.0
        %665 = vmatpush2.msra.mxu0 0.0
        %666 = vmatprep.subr.mxu0 0.0
        %667 = vmatpush2.msra.mxu0 0.0
        %668 = vmatprep.subr.mxu0 0.0
        %669 = vmatpush2.msra.mxu0 0.0
        %670 = vmatprep.subr.mxu0 0.0
        %671 = vmatpush2.msra.mxu0 0.0
        %672 = vmatprep.subr.mxu0 0.0
        %673 = vmatpush2.msra.mxu0 0.0
        %674 = vmatprep.subr.mxu0 0.0
        %675 = vmatpush2.msra.mxu0 0.0
        %676 = vmatprep.subr.mxu0 0.0
        %677 = vmatpush2.msra.mxu0 0.0
        %678 = vmatprep.subr.mxu0 0.0
        %679 = vmatpush2.msra.mxu0 0.0
        %680 = vmatprep.subr.mxu0 0.0
        %681 = vmatpush2.msra.mxu0 0.0
        %682 = vmatprep.subr.mxu0 0.0
        %683 = vmatpush2.msra.mxu0 0.0
        %684 = vmatprep.subr.mxu0 0.0
        %685 = vmatpush2.msra.mxu0 0.0
        %686 = vmatprep.subr.mxu0 0.0
        %687 = vmatpush2.msra.mxu0 0.0
        %688 = vmatprep.subr.mxu0 0.0
        %689 = vmatpush2.msra.mxu0 0.0
        %690 = vmatprep.subr.mxu0 0.0
        %691 = vmatpush2.msra.mxu0 0.0
        %692 = vmatprep.subr.mxu0 0.0
        %693 = vmatpush2.msra.mxu0 0.0
        %694 = vmatprep.subr.mxu0 0.0
        %695 = vmatpush2.msra.mxu0 0.0
        %696 = vmatprep.mubr.f32.mxu0 0.0
        %697 = vmatmul.mubr.f32.gmra.mxu0 %v630
        %v698 = vpop.f32.mrf.mxu0
        %v699 = vadd.f32 %v626, %v698
        %v700 = vpop.f32.mrf.mxu0
        %701 = vdwg.mxu0
        %702 = vst [vmem:[%s422] sm:$0xff] %v699
        %s703 = sand.u32 %s181, 1
        %s704 = scalar_lea.sflag [#allocation4], %s703
        %s705 = sand.u32 %s181, 1
        %s706 = smul.addr %s705, 8
        %s707 = scalar_lea.vmem [#allocation10], %s706
        // Predicated region
        $region98: #{tpu_custom_call.1} parent=80 // pred_check
          %p708 = pneg %p191
        $region99: #{tpu_custom_call.1} parent=80 // pred_check_branch
          %710 = sbr.rel (%p708) target = $region101
        $region100: #{tpu_custom_call.1} parent=80 // pred_region
          %s712 = ssub.s32 128, 128
          %713 = vsyncadd %s704, %s712
          %s714 = smul.addr %s27, 128
          %s715 = scalar_lea.hbm %s6, %s714
          %s717 = sshll.u32 %s707, 4
          %s718 = int_to_ptr.vmem [resolvable:$true] %s717
          %720 = dma.vmem_to_hbm [thread:$0]  %s718, 128, %s715, %s704
        $region101: #{tpu_custom_call.1} parent=80 // pred_fallthru
          _
      $region81: #{tpu_custom_call.1} parent=5 // pred_fallthru
        _
      %p721 = scmp.le.s32.totalorder 2, %s22
      // Predicated region
      $region102: #{tpu_custom_call.1} parent=5 // pred_check
        %p722 = pneg %p721
      $region103: #{tpu_custom_call.1} parent=5 // pred_check_branch
        %724 = sbr.rel (%p722) target = $region105
      $region104: #{tpu_custom_call.1} parent=5 // pred_region
        %s725 = ssub.s32 %s22, 2
        // Predicated region
        $region106: #{tpu_custom_call.1} parent=104 // pred_check
          %p726 = pneg %p197
        $region107: #{tpu_custom_call.1} parent=104 // pred_check_branch
          %728 = sbr.rel (%p726) target = $region109
        $region108: #{tpu_custom_call.1} parent=104 // pred_region
          %s729 = sand.u32 %s182, 1
          %s730 = scalar_lea.sflag [#allocation4], %s729
          %s731 = sand.u32 %s182, 1
          %s732 = smul.addr %s731, 8
          %s733 = scalar_lea.vmem [#allocation10], %s732
          %734 = dma.done %s730, 128
        $region109: #{tpu_custom_call.1} parent=104 // pred_fallthru
          _
      $region105: #{tpu_custom_call.1} parent=5 // pred_fallthru
        _
    $region6: #{tpu_custom_call.1} parent=1 // loop_footer
      %s26 = sadd.s32 1, %s22
    $region7: #{tpu_custom_call.1} parent=1 // loop_footer_branch
      %21 = sbr.rel target = $region3
    $region8: #{tpu_custom_call.1} parent=1 // loop_exit
      _
    %735 = vsyncpa [#allocation3], 1
    %s736 = scalar_lea.sflag [#allocation3], 1
    %737 = vsyncpa %s736, 1
    %738 = vsyncpa [#allocation9], 1
    %s739 = scalar_lea.sflag [#allocation9], 1
    %740 = vsyncpa %s739, 1
    %741 = vsyncpa [#allocation4], 1
    %s742 = scalar_lea.sflag [#allocation4], 1
    %743 = vsyncpa %s742, 1
    %744 = vsyncpa [#allocation5], 1
    %s745 = scalar_lea.sflag [#allocation5], 1
    %746 = vsyncpa %s745, 1

</llo_original>
